<compile_context>
chip_gen: v6e
topology: v6e:2x2x1
jax: 0.10.0
libtpu: 0.0.40
codegen_flags: <defaults>
</compile_context>

<pallas_src>
import jax
import jax.numpy as jnp
from jax import lax
from jax.experimental import pallas as pl
from jax.experimental.pallas import tpu as pltpu

IN_DIM = 1      # Linear(1, 20)
HID_DIM = 20
OUT_DIM = 1     # Linear(20, 1)

LANES = 128                 # lane-dense last dim
DEFAULT_BLOCK_ROWS = 4096   # 4096 x 128 f32 = 2 MiB; in+out double-buffered = 8 MiB
                            # (fits v5e 16 MiB / v6e 32 MiB / v7x 32 MiB scoped defaults)
CHUNK_ROWS = 128            # 128 x 128 f32 = 16 vregs per live temporary


def _round_up(v, m):
    return ((v + m - 1) // m) * m


def mlp_kernel(p_ref, q_ref, r_ref, t_ref, x_ref, o_ref):
    """y = P*x + Q + sum_j r_j * |x + t_j|   (elementwise, pure VPU).

    x_ref/o_ref : (block_rows, 128) f32 tiles in VMEM (lane-dense).
    p_ref/q_ref : (1,) f32 in SMEM;  r_ref/t_ref : (HID_DIM,) f32 in SMEM.
    """
    P = p_ref[0]
    Q = q_ref[0]
    block_rows = x_ref.shape[0]

    def process(start, nrows):
        # nrows is static; start is dynamic (chunk loop) or static (tail).
        x = x_ref[pl.ds(start, nrows), :]
        acc = x * P + Q                        # bias folded into accumulator init
        for j in range(HID_DIM):               # fully unrolled, 4 VALU ops per term
            acc = acc + r_ref[j] * jnp.abs(x + t_ref[j])
        o_ref[pl.ds(start, nrows), :] = acc

    # Process the block in row chunks to bound vreg pressure (x, acc, tmp ~ 48 vregs).
    n_full = block_rows // CHUNK_ROWS          # static
    tail = block_rows % CHUNK_ROWS             # static, multiple of 8

    if n_full > 0:
        def body(c, carry):
            process(pl.multiple_of(c * CHUNK_ROWS, CHUNK_ROWS), CHUNK_ROWS)
            return carry
        lax.fori_loop(0, n_full, body, 0)
    if tail > 0:
        process(n_full * CHUNK_ROWS, tail)


def net_forward(x, w1, b1, w2, b2, *, block_rows=DEFAULT_BLOCK_ROWS):
    """Pallas implementation of Net.forward.

    x  : (N, 1)  float32
    w1 : (1, 20) float32   hidden weight, (in_features, out_features) layout
    b1 : (20,)   float32
    w2 : (20, 1) float32   predict weight, (in_features, out_features) layout
    b2 : (1,)    float32
    NOTE: PyTorch nn.Linear.weight is (out_features, in_features); transpose it
    when porting a real state_dict into this layout.
    returns (N, 1) float32
    """
    n = x.shape[0]

    # ---- wrapper-side algebraic fold: y = P*x + Q + sum_j r_j*|x + t_j| ----
    w1f = w1.reshape(HID_DIM).astype(jnp.float32)
    b1f = b1.reshape(HID_DIM).astype(jnp.float32)
    w2f = w2.reshape(HID_DIM).astype(jnp.float32)
    b2f = b2.reshape(OUT_DIM).astype(jnp.float32)

    nz = w1f != 0.0
    P = jnp.sum(0.5 * w1f * w2f).reshape(1)
    Q = (b2f[0]
         + jnp.sum(jnp.where(nz, 0.5 * b1f * w2f, jnp.maximum(b1f, 0.0) * w2f))
         ).reshape(1)
    r = jnp.where(nz, 0.5 * jnp.abs(w1f) * w2f, 0.0)
    t = jnp.where(nz, b1f / jnp.where(nz, w1f, 1.0), 0.0)

    # ---- lane-dense layout: (N, 1) -> (rows, 128); pad only the partial last row ----
    rows = pl.cdiv(n, LANES)
    padded_len = rows * LANES
    flat = x.reshape(-1).astype(jnp.float32)
    if padded_len != n:
        flat = jnp.pad(flat, (0, padded_len - n))
    x2d = flat.reshape(rows, LANES)

    # block_rows: multiple of 8, no larger than the (rounded-up) row count, and
    # capped so the grid has >=2 steps when there is enough work (v7x has 2 TCs;
    # the extra ~0.35 us step is negligible on v5e/v6e).
    block_rows = max(8, _round_up(min(block_rows, rows), 8))
    if rows >= 16:
        block_rows = min(block_rows, _round_up(pl.cdiv(rows, 2), 8))

    grid = (pl.cdiv(rows, block_rows),)        # partial last block masked by Pallas
    smem_spec = pl.BlockSpec(memory_space=pltpu.MemorySpace.SMEM)

    out2d = pl.pallas_call(
        mlp_kernel,
        out_shape=jax.ShapeDtypeStruct((rows, LANES), jnp.float32),
        grid=grid,
        in_specs=[
            smem_spec,   # P
            smem_spec,   # Q
            smem_spec,   # r
            smem_spec,   # t
            pl.BlockSpec((block_rows, LANES), lambda i: (i, 0)),
        ],
        out_specs=pl.BlockSpec((block_rows, LANES), lambda i: (i, 0)),
        compiler_params=pltpu.CompilerParams(
            dimension_semantics=("parallel",)),
        cost_estimate=pl.CostEstimate(
            flops=64 * padded_len, transcendentals=0, bytes_accessed=8 * padded_len),
    )(P, Q, r, t, x2d)

    out = out2d.reshape(-1)
    if padded_len != n:
        out = out[:n]
    return out.reshape(n, OUT_DIM)


if __name__ == "__main__":
    key = jax.random.PRNGKey(0)
    k_w1, k_b1, k_w2, k_b2 = jax.random.split(key, 4)

    # Deterministic parameter init (shapes implied by Net.__init__).
    w1 = jax.random.uniform(k_w1, (IN_DIM, HID_DIM), jnp.float32, -1.0, 1.0)
    b1 = jax.random.uniform(k_b1, (HID_DIM,), jnp.float32, -1.0, 1.0)
    w2 = jax.random.uniform(k_w2, (HID_DIM, OUT_DIM), jnp.float32, -1.0, 1.0)
    b2 = jax.random.uniform(k_b2, (OUT_DIM,), jnp.float32, -1.0, 1.0)

    # N = 1000 matches the spec (torch.unsqueeze(torch.linspace(-1,1,1000), 1));
    # N = 70000 additionally exercises the multi-block grid, the masked partial
    # last block, and the in-kernel chunk loop.
    for n in (1000, 70_000):
        x = jnp.linspace(-1.0, 1.0, n, dtype=jnp.float32).reshape(n, 1)
        out = jax.block_until_ready(net_forward(x, w1, b1, w2, b2))

        # Reference in plain JAX (same math as the PyTorch forward).
        ref = jnp.maximum(x @ w1 + b1, 0.0) @ w2 + b2
        assert out.shape == (n, OUT_DIM)
        assert jnp.allclose(out, ref, atol=1e-5, rtol=1e-5), float(
            jnp.max(jnp.abs(out - ref)))

    print("KERNEL_OK")
</pallas_src>

<mosaic_0001>
module attributes {stable_mosaic.version = 11 : i64} {
  func.func @mlp_kernel(%arg0: i32, %arg1: memref<1xf32, #tpu.memory_space<smem>>, %arg2: memref<1xf32, #tpu.memory_space<smem>>, %arg3: memref<20xf32, #tpu.memory_space<smem>>, %arg4: memref<20xf32, #tpu.memory_space<smem>>, %arg5: memref<8x128xf32, #tpu.memory_space<vmem>>, %arg6: memref<8x128xf32, #tpu.memory_space<vmem>>) attributes {dimension_semantics = [#tpu.dimension_semantics<parallel>], iteration_bounds = array<i64: 1>, scalar_prefetch = 0 : i64, scratch_operands = 0 : i64, tpu.core_type = #tpu.core_type<tc>, window_params = [{transform_indices = @transform_0, window_bounds = array<i64: 1>}, {transform_indices = @transform_1, window_bounds = array<i64: 1>}, {transform_indices = @transform_2, window_bounds = array<i64: 20>}, {transform_indices = @transform_3, window_bounds = array<i64: 20>}, {transform_indices = @transform_4, window_bounds = array<i64: 8, 128>}, {transform_indices = @transform_5, window_bounds = array<i64: 8, 128>}]} {
    %c0 = arith.constant 0 : index
    %0 = memref.load %arg1[%c0] : memref<1xf32, #tpu.memory_space<smem>>
    %c0_0 = arith.constant 0 : index
    %1 = memref.load %arg2[%c0_0] : memref<1xf32, #tpu.memory_space<smem>>
    %c0_1 = arith.constant 0 : index
    %c0_2 = arith.constant 0 : index
    %2 = vector.load %arg5[%c0_1, %c0_2] : memref<8x128xf32, #tpu.memory_space<vmem>>, vector<8x128xf32>
    %3 = vector.broadcast %0 : f32 to vector<8x128xf32>
    %4 = arith.mulf %2, %3 : vector<8x128xf32>
    %5 = vector.broadcast %1 : f32 to vector<8x128xf32>
    %6 = arith.addf %4, %5 : vector<8x128xf32>
    %c0_3 = arith.constant 0 : index
    %7 = memref.load %arg3[%c0_3] : memref<20xf32, #tpu.memory_space<smem>>
    %c0_4 = arith.constant 0 : index
    %8 = memref.load %arg4[%c0_4] : memref<20xf32, #tpu.memory_space<smem>>
    %9 = vector.broadcast %8 : f32 to vector<8x128xf32>
    %10 = arith.addf %2, %9 : vector<8x128xf32>
    %11 = math.absf %10 : vector<8x128xf32>
    %12 = vector.broadcast %7 : f32 to vector<8x128xf32>
    %13 = arith.mulf %12, %11 : vector<8x128xf32>
    %14 = arith.addf %6, %13 : vector<8x128xf32>
    %c1 = arith.constant 1 : index
    %15 = memref.load %arg3[%c1] : memref<20xf32, #tpu.memory_space<smem>>
    %c1_5 = arith.constant 1 : index
    %16 = memref.load %arg4[%c1_5] : memref<20xf32, #tpu.memory_space<smem>>
    %17 = vector.broadcast %16 : f32 to vector<8x128xf32>
    %18 = arith.addf %2, %17 : vector<8x128xf32>
    %19 = math.absf %18 : vector<8x128xf32>
    %20 = vector.broadcast %15 : f32 to vector<8x128xf32>
    %21 = arith.mulf %20, %19 : vector<8x128xf32>
    %22 = arith.addf %14, %21 : vector<8x128xf32>
    %c2 = arith.constant 2 : index
    %23 = memref.load %arg3[%c2] : memref<20xf32, #tpu.memory_space<smem>>
    %c2_6 = arith.constant 2 : index
    %24 = memref.load %arg4[%c2_6] : memref<20xf32, #tpu.memory_space<smem>>
    %25 = vector.broadcast %24 : f32 to vector<8x128xf32>
    %26 = arith.addf %2, %25 : vector<8x128xf32>
    %27 = math.absf %26 : vector<8x128xf32>
    %28 = vector.broadcast %23 : f32 to vector<8x128xf32>
    %29 = arith.mulf %28, %27 : vector<8x128xf32>
    %30 = arith.addf %22, %29 : vector<8x128xf32>
    %c3 = arith.constant 3 : index
    %31 = memref.load %arg3[%c3] : memref<20xf32, #tpu.memory_space<smem>>
    %c3_7 = arith.constant 3 : index
    %32 = memref.load %arg4[%c3_7] : memref<20xf32, #tpu.memory_space<smem>>
    %33 = vector.broadcast %32 : f32 to vector<8x128xf32>
    %34 = arith.addf %2, %33 : vector<8x128xf32>
    %35 = math.absf %34 : vector<8x128xf32>
    %36 = vector.broadcast %31 : f32 to vector<8x128xf32>
    %37 = arith.mulf %36, %35 : vector<8x128xf32>
    %38 = arith.addf %30, %37 : vector<8x128xf32>
    %c4 = arith.constant 4 : index
    %39 = memref.load %arg3[%c4] : memref<20xf32, #tpu.memory_space<smem>>
    %c4_8 = arith.constant 4 : index
    %40 = memref.load %arg4[%c4_8] : memref<20xf32, #tpu.memory_space<smem>>
    %41 = vector.broadcast %40 : f32 to vector<8x128xf32>
    %42 = arith.addf %2, %41 : vector<8x128xf32>
    %43 = math.absf %42 : vector<8x128xf32>
    %44 = vector.broadcast %39 : f32 to vector<8x128xf32>
    %45 = arith.mulf %44, %43 : vector<8x128xf32>
    %46 = arith.addf %38, %45 : vector<8x128xf32>
    %c5 = arith.constant 5 : index
    %47 = memref.load %arg3[%c5] : memref<20xf32, #tpu.memory_space<smem>>
    %c5_9 = arith.constant 5 : index
    %48 = memref.load %arg4[%c5_9] : memref<20xf32, #tpu.memory_space<smem>>
    %49 = vector.broadcast %48 : f32 to vector<8x128xf32>
    %50 = arith.addf %2, %49 : vector<8x128xf32>
    %51 = math.absf %50 : vector<8x128xf32>
    %52 = vector.broadcast %47 : f32 to vector<8x128xf32>
    %53 = arith.mulf %52, %51 : vector<8x128xf32>
    %54 = arith.addf %46, %53 : vector<8x128xf32>
    %c6 = arith.constant 6 : index
    %55 = memref.load %arg3[%c6] : memref<20xf32, #tpu.memory_space<smem>>
    %c6_10 = arith.constant 6 : index
    %56 = memref.load %arg4[%c6_10] : memref<20xf32, #tpu.memory_space<smem>>
    %57 = vector.broadcast %56 : f32 to vector<8x128xf32>
    %58 = arith.addf %2, %57 : vector<8x128xf32>
    %59 = math.absf %58 : vector<8x128xf32>
    %60 = vector.broadcast %55 : f32 to vector<8x128xf32>
    %61 = arith.mulf %60, %59 : vector<8x128xf32>
    %62 = arith.addf %54, %61 : vector<8x128xf32>
    %c7 = arith.constant 7 : index
    %63 = memref.load %arg3[%c7] : memref<20xf32, #tpu.memory_space<smem>>
    %c7_11 = arith.constant 7 : index
    %64 = memref.load %arg4[%c7_11] : memref<20xf32, #tpu.memory_space<smem>>
    %65 = vector.broadcast %64 : f32 to vector<8x128xf32>
    %66 = arith.addf %2, %65 : vector<8x128xf32>
    %67 = math.absf %66 : vector<8x128xf32>
    %68 = vector.broadcast %63 : f32 to vector<8x128xf32>
    %69 = arith.mulf %68, %67 : vector<8x128xf32>
    %70 = arith.addf %62, %69 : vector<8x128xf32>
    %c8 = arith.constant 8 : index
    %71 = memref.load %arg3[%c8] : memref<20xf32, #tpu.memory_space<smem>>
    %c8_12 = arith.constant 8 : index
    %72 = memref.load %arg4[%c8_12] : memref<20xf32, #tpu.memory_space<smem>>
    %73 = vector.broadcast %72 : f32 to vector<8x128xf32>
    %74 = arith.addf %2, %73 : vector<8x128xf32>
    %75 = math.absf %74 : vector<8x128xf32>
    %76 = vector.broadcast %71 : f32 to vector<8x128xf32>
    %77 = arith.mulf %76, %75 : vector<8x128xf32>
    %78 = arith.addf %70, %77 : vector<8x128xf32>
    %c9 = arith.constant 9 : index
    %79 = memref.load %arg3[%c9] : memref<20xf32, #tpu.memory_space<smem>>
    %c9_13 = arith.constant 9 : index
    %80 = memref.load %arg4[%c9_13] : memref<20xf32, #tpu.memory_space<smem>>
    %81 = vector.broadcast %80 : f32 to vector<8x128xf32>
    %82 = arith.addf %2, %81 : vector<8x128xf32>
    %83 = math.absf %82 : vector<8x128xf32>
    %84 = vector.broadcast %79 : f32 to vector<8x128xf32>
    %85 = arith.mulf %84, %83 : vector<8x128xf32>
    %86 = arith.addf %78, %85 : vector<8x128xf32>
    %c10 = arith.constant 10 : index
    %87 = memref.load %arg3[%c10] : memref<20xf32, #tpu.memory_space<smem>>
    %c10_14 = arith.constant 10 : index
    %88 = memref.load %arg4[%c10_14] : memref<20xf32, #tpu.memory_space<smem>>
    %89 = vector.broadcast %88 : f32 to vector<8x128xf32>
    %90 = arith.addf %2, %89 : vector<8x128xf32>
    %91 = math.absf %90 : vector<8x128xf32>
    %92 = vector.broadcast %87 : f32 to vector<8x128xf32>
    %93 = arith.mulf %92, %91 : vector<8x128xf32>
    %94 = arith.addf %86, %93 : vector<8x128xf32>
    %c11 = arith.constant 11 : index
    %95 = memref.load %arg3[%c11] : memref<20xf32, #tpu.memory_space<smem>>
    %c11_15 = arith.constant 11 : index
    %96 = memref.load %arg4[%c11_15] : memref<20xf32, #tpu.memory_space<smem>>
    %97 = vector.broadcast %96 : f32 to vector<8x128xf32>
    %98 = arith.addf %2, %97 : vector<8x128xf32>
    %99 = math.absf %98 : vector<8x128xf32>
    %100 = vector.broadcast %95 : f32 to vector<8x128xf32>
    %101 = arith.mulf %100, %99 : vector<8x128xf32>
    %102 = arith.addf %94, %101 : vector<8x128xf32>
    %c12 = arith.constant 12 : index
    %103 = memref.load %arg3[%c12] : memref<20xf32, #tpu.memory_space<smem>>
    %c12_16 = arith.constant 12 : index
    %104 = memref.load %arg4[%c12_16] : memref<20xf32, #tpu.memory_space<smem>>
    %105 = vector.broadcast %104 : f32 to vector<8x128xf32>
    %106 = arith.addf %2, %105 : vector<8x128xf32>
    %107 = math.absf %106 : vector<8x128xf32>
    %108 = vector.broadcast %103 : f32 to vector<8x128xf32>
    %109 = arith.mulf %108, %107 : vector<8x128xf32>
    %110 = arith.addf %102, %109 : vector<8x128xf32>
    %c13 = arith.constant 13 : index
    %111 = memref.load %arg3[%c13] : memref<20xf32, #tpu.memory_space<smem>>
    %c13_17 = arith.constant 13 : index
    %112 = memref.load %arg4[%c13_17] : memref<20xf32, #tpu.memory_space<smem>>
    %113 = vector.broadcast %112 : f32 to vector<8x128xf32>
    %114 = arith.addf %2, %113 : vector<8x128xf32>
    %115 = math.absf %114 : vector<8x128xf32>
    %116 = vector.broadcast %111 : f32 to vector<8x128xf32>
    %117 = arith.mulf %116, %115 : vector<8x128xf32>
    %118 = arith.addf %110, %117 : vector<8x128xf32>
    %c14 = arith.constant 14 : index
    %119 = memref.load %arg3[%c14] : memref<20xf32, #tpu.memory_space<smem>>
    %c14_18 = arith.constant 14 : index
    %120 = memref.load %arg4[%c14_18] : memref<20xf32, #tpu.memory_space<smem>>
    %121 = vector.broadcast %120 : f32 to vector<8x128xf32>
    %122 = arith.addf %2, %121 : vector<8x128xf32>
    %123 = math.absf %122 : vector<8x128xf32>
    %124 = vector.broadcast %119 : f32 to vector<8x128xf32>
    %125 = arith.mulf %124, %123 : vector<8x128xf32>
    %126 = arith.addf %118, %125 : vector<8x128xf32>
    %c15 = arith.constant 15 : index
    %127 = memref.load %arg3[%c15] : memref<20xf32, #tpu.memory_space<smem>>
    %c15_19 = arith.constant 15 : index
    %128 = memref.load %arg4[%c15_19] : memref<20xf32, #tpu.memory_space<smem>>
    %129 = vector.broadcast %128 : f32 to vector<8x128xf32>
    %130 = arith.addf %2, %129 : vector<8x128xf32>
    %131 = math.absf %130 : vector<8x128xf32>
    %132 = vector.broadcast %127 : f32 to vector<8x128xf32>
    %133 = arith.mulf %132, %131 : vector<8x128xf32>
    %134 = arith.addf %126, %133 : vector<8x128xf32>
    %c16 = arith.constant 16 : index
    %135 = memref.load %arg3[%c16] : memref<20xf32, #tpu.memory_space<smem>>
    %c16_20 = arith.constant 16 : index
    %136 = memref.load %arg4[%c16_20] : memref<20xf32, #tpu.memory_space<smem>>
    %137 = vector.broadcast %136 : f32 to vector<8x128xf32>
    %138 = arith.addf %2, %137 : vector<8x128xf32>
    %139 = math.absf %138 : vector<8x128xf32>
    %140 = vector.broadcast %135 : f32 to vector<8x128xf32>
    %141 = arith.mulf %140, %139 : vector<8x128xf32>
    %142 = arith.addf %134, %141 : vector<8x128xf32>
    %c17 = arith.constant 17 : index
    %143 = memref.load %arg3[%c17] : memref<20xf32, #tpu.memory_space<smem>>
    %c17_21 = arith.constant 17 : index
    %144 = memref.load %arg4[%c17_21] : memref<20xf32, #tpu.memory_space<smem>>
    %145 = vector.broadcast %144 : f32 to vector<8x128xf32>
    %146 = arith.addf %2, %145 : vector<8x128xf32>
    %147 = math.absf %146 : vector<8x128xf32>
    %148 = vector.broadcast %143 : f32 to vector<8x128xf32>
    %149 = arith.mulf %148, %147 : vector<8x128xf32>
    %150 = arith.addf %142, %149 : vector<8x128xf32>
    %c18 = arith.constant 18 : index
    %151 = memref.load %arg3[%c18] : memref<20xf32, #tpu.memory_space<smem>>
    %c18_22 = arith.constant 18 : index
    %152 = memref.load %arg4[%c18_22] : memref<20xf32, #tpu.memory_space<smem>>
    %153 = vector.broadcast %152 : f32 to vector<8x128xf32>
    %154 = arith.addf %2, %153 : vector<8x128xf32>
    %155 = math.absf %154 : vector<8x128xf32>
    %156 = vector.broadcast %151 : f32 to vector<8x128xf32>
    %157 = arith.mulf %156, %155 : vector<8x128xf32>
    %158 = arith.addf %150, %157 : vector<8x128xf32>
    %c19 = arith.constant 19 : index
    %159 = memref.load %arg3[%c19] : memref<20xf32, #tpu.memory_space<smem>>
    %c19_23 = arith.constant 19 : index
    %160 = memref.load %arg4[%c19_23] : memref<20xf32, #tpu.memory_space<smem>>
    %161 = vector.broadcast %160 : f32 to vector<8x128xf32>
    %162 = arith.addf %2, %161 : vector<8x128xf32>
    %163 = math.absf %162 : vector<8x128xf32>
    %164 = vector.broadcast %159 : f32 to vector<8x128xf32>
    %165 = arith.mulf %164, %163 : vector<8x128xf32>
    %166 = arith.addf %158, %165 : vector<8x128xf32>
    %c0_24 = arith.constant 0 : index
    %c0_25 = arith.constant 0 : index
    %167 = vector.load %arg6[%c0_24, %c0_25] : memref<8x128xf32, #tpu.memory_space<vmem>>, vector<8x128xf32>
    tpu.vector_store %arg6[%c0_24, %c0_25], %166 {strides = array<i32>} : memref<8x128xf32, #tpu.memory_space<vmem>>, vector<8x128xf32>,
    return
  }
  func.func @transform_0(%arg0: i32) -> i32 {
    %c0_i32 = arith.constant 0 : i32
    %c0_i32_0 = arith.constant 0 : i32
    return %c0_i32 : i32
  }
  func.func @transform_1(%arg0: i32) -> i32 {
    %c0_i32 = arith.constant 0 : i32
    %c0_i32_0 = arith.constant 0 : i32
    return %c0_i32 : i32
  }
  func.func @transform_2(%arg0: i32) -> i32 {
    %c0_i32 = arith.constant 0 : i32
    %c0_i32_0 = arith.constant 0 : i32
    return %c0_i32 : i32
  }
  func.func @transform_3(%arg0: i32) -> i32 {
    %c0_i32 = arith.constant 0 : i32
    %c0_i32_0 = arith.constant 0 : i32
    return %c0_i32 : i32
  }
  func.func @transform_4(%arg0: i32) -> (i32, i32) {
    %c0_i32 = arith.constant 0 : i32
    %c0_i32_0 = arith.constant 0 : i32
    return %arg0, %c0_i32 : i32, i32
  }
  func.func @transform_5(%arg0: i32) -> (i32, i32) {
    %c0_i32 = arith.constant 0 : i32
    %c0_i32_0 = arith.constant 0 : i32
    return %arg0, %c0_i32 : i32, i32
  }
}

</mosaic_0001>

<llo_original>
// kernel: tpu_custom_call.1
$region0: #{tpu_custom_call.1}
  #allocation0 [shape = 'u32[]', space=smem, size = 0x4, offset = 0x4, fixed_abs, tag = 'smem constant byte address 0x4 - core index']
  #allocation1 [shape = 'u32[144,128]{1,0:T(1,128)}', space=vmem, size = 0x12000, scoped, tag = 'internal scratch']
  #allocation2 [shape = 'f32[1]{0:T(128)S(6)}', space=smem, size = 0x200, scoped, tag = 'scoped memory for tpu_custom_call.1']
  #allocation3 [shape = 'f32[1]{0:T(128)S(6)}', space=smem, size = 0x200, scoped, tag = 'scoped memory for tpu_custom_call.1']
  %s0 = inlined_call_operand.<no memory space> [shape: f32[1], index: 0, kind: input, shape index: {}]
  %s1 = inlined_call_operand.<no memory space> [shape: f32[1], index: 1, kind: input, shape index: {}]
  %s2 = inlined_call_operand.vmem [shape: f32[20], index: 2, kind: input, shape index: {}]
  %s3 = inlined_call_operand.vmem [shape: f32[20], index: 3, kind: input, shape index: {}]
  %s4 = inlined_call_operand.hbm [shape: f32[8,128], index: 4, kind: input, shape index: {}]
  %s5 = inlined_call_operand.hbm [shape: f32[8,128], index: 5, kind: output, shape index: {}]
  %s6 = sld [smem:[#allocation0]]
  $region42: #{tpu_custom_call.1} parent=0
    _
  %s8 = ssub.s32 1, %s6
  %s9 = scalar_select 0, %s8, %s6
  %10 = sst [smem:[#allocation2]] %s0
  %11 = sst [smem:[#allocation3]] %s1
  $region1: #{tpu_custom_call.1} parent=0
    #allocation4 [shape = 'u8[512]{0}', space=smem, size = 0x200, scoped, tag = 'input window, operand 2, single buffered']
    #allocation5 [shape = 's32[1]{0}', space=sflag, size = 0x4, scoped, tag = 'scoped memory for tpu_custom_call.1']
    #allocation6 [shape = 's32[1]{0}', space=sflag, size = 0x4, scoped, tag = 'scoped memory for tpu_custom_call.1']
    #allocation7 [shape = 's32[1]{0}', space=sflag, size = 0x4, scoped, tag = 'scoped memory for tpu_custom_call.1']
    #allocation8 [shape = 'u8[512]{0}', space=smem, size = 0x200, scoped, tag = 'input window, operand 3, single buffered']
    #allocation9 [shape = 's32[1]{0}', space=sflag, size = 0x4, scoped, tag = 'scoped memory for tpu_custom_call.1']
    #allocation10 [shape = 'u8[4096]{0}', space=vmem, size = 0x1000, scoped, tag = 'input window, operand 4, single buffered']
    #allocation11 [shape = 'u8[4096]{0}', space=vmem, size = 0x1000, scoped, tag = 'output window, operand 0, single buffered']
    %12 = vsyncpa [#allocation7], 0
    %13 = vsyncpa [#allocation9], 0
    %14 = vsyncpa [#allocation5], 0
    %15 = vsyncpa [#allocation6], 0
    // Predicated region
    $region2: #{tpu_custom_call.1} parent=1 // pred_check
      _
    $region3: #{tpu_custom_call.1} parent=1 // pred_check_branch
      %17 = sbr.rel (0) target = $region5
    $region4: #{tpu_custom_call.1} parent=1 // pred_region
      _
    $region5: #{tpu_custom_call.1} parent=1 // pred_fallthru
      _
    // Predicated region
    $region6: #{tpu_custom_call.1} parent=1 // pred_check
      _
    $region7: #{tpu_custom_call.1} parent=1 // pred_check_branch
      %19 = sbr.rel (0) target = $region9
    $region8: #{tpu_custom_call.1} parent=1 // pred_region
      _
    $region9: #{tpu_custom_call.1} parent=1 // pred_fallthru
      _
    // Predicated region
    $region10: #{tpu_custom_call.1} parent=1 // pred_check
      _
    $region11: #{tpu_custom_call.1} parent=1 // pred_check_branch
      %21 = sbr.rel (0) target = $region13
    $region12: #{tpu_custom_call.1} parent=1 // pred_region
      %s23 = ssub.s32 16, 16
      %24 = vsyncadd [#allocation7], %s23
      %s26 = sshll.u32 %s2, 4
      %s27 = int_to_ptr.vmem [resolvable:$true] %s26
      %29 = dma.vmem_to_smem %s27, 16, [#allocation4], [#allocation7]
    $region13: #{tpu_custom_call.1} parent=1 // pred_fallthru
      _
    // Predicated region
    $region14: #{tpu_custom_call.1} parent=1 // pred_check
      _
    $region15: #{tpu_custom_call.1} parent=1 // pred_check_branch
      %31 = sbr.rel (0) target = $region17
    $region16: #{tpu_custom_call.1} parent=1 // pred_region
      %s33 = ssub.s32 16, 16
      %34 = vsyncadd [#allocation9], %s33
      %s36 = sshll.u32 %s3, 4
      %s37 = int_to_ptr.vmem [resolvable:$true] %s36
      %39 = dma.vmem_to_smem %s37, 16, [#allocation8], [#allocation9]
    $region17: #{tpu_custom_call.1} parent=1 // pred_fallthru
      _
    // Predicated region
    $region18: #{tpu_custom_call.1} parent=1 // pred_check
      _
    $region19: #{tpu_custom_call.1} parent=1 // pred_check_branch
      %41 = sbr.rel (0) target = $region21
    $region20: #{tpu_custom_call.1} parent=1 // pred_region
      %s43 = ssub.s32 128, 128
      %44 = vsyncadd [#allocation5], %s43
      %s46 = sshll.u32 [#allocation10], 4
      %s47 = int_to_ptr.vmem [resolvable:$true] %s46
      %49 = dma.hbm_to_vmem [thread:$0]  %s4, 128, %s47, [#allocation5]
    $region21: #{tpu_custom_call.1} parent=1 // pred_fallthru
      _
    // Predicated region
    $region22: #{tpu_custom_call.1} parent=1 // pred_check
      _
    $region23: #{tpu_custom_call.1} parent=1 // pred_check_branch
      %51 = sbr.rel (0) target = $region25
    $region24: #{tpu_custom_call.1} parent=1 // pred_region
      %52 = dma.done [#allocation7], 16
    $region25: #{tpu_custom_call.1} parent=1 // pred_fallthru
      _
    // Predicated region
    $region26: #{tpu_custom_call.1} parent=1 // pred_check
      _
    $region27: #{tpu_custom_call.1} parent=1 // pred_check_branch
      %54 = sbr.rel (0) target = $region29
    $region28: #{tpu_custom_call.1} parent=1 // pred_region
      %55 = dma.done [#allocation9], 16
    $region29: #{tpu_custom_call.1} parent=1 // pred_fallthru
      _
    // Predicated region
    $region30: #{tpu_custom_call.1} parent=1 // pred_check
      _
    $region31: #{tpu_custom_call.1} parent=1 // pred_check_branch
      %57 = sbr.rel (0) target = $region33
    $region32: #{tpu_custom_call.1} parent=1 // pred_region
      %58 = dma.done [#allocation5], 128
    $region33: #{tpu_custom_call.1} parent=1 // pred_fallthru
      _
    %59 = sfence
    %s60 = sld [smem:[#allocation2]]
    %s61 = sld [smem:[#allocation3]]
    %v62 = vld [vmem:[#allocation10] sm:$0xff]
    %v63 = vstv %s60
    %v64 = vmul.f32 %v62, %v63
    %v65 = vstv %s61
    %v66 = vadd.f32 %v64, %v65
    %s67 = sld [smem:[#allocation4]]
    %s68 = sld [smem:[#allocation8]]
    %v69 = vstv %s68
    %v70 = vadd.f32 %v62, %v69
    %v71 = vand.u32 2147483647, %v70
    %v72 = vstv %s67
    %v73 = vmul.f32 %v72, %v71
    %v74 = vadd.f32 %v66, %v73
    %s75 = sld [smem:[#allocation4 + $0x1]]
    %s76 = sld [smem:[#allocation8 + $0x1]]
    %v77 = vstv %s76
    %v78 = vadd.f32 %v62, %v77
    %v79 = vand.u32 2147483647, %v78
    %v80 = vstv %s75
    %v81 = vmul.f32 %v80, %v79
    %v82 = vadd.f32 %v74, %v81
    %s83 = sld [smem:[#allocation4 + $0x2]]
    %s84 = sld [smem:[#allocation8 + $0x2]]
    %v85 = vstv %s84
    %v86 = vadd.f32 %v62, %v85
    %v87 = vand.u32 2147483647, %v86
    %v88 = vstv %s83
    %v89 = vmul.f32 %v88, %v87
    %v90 = vadd.f32 %v82, %v89
    %s91 = sld [smem:[#allocation4 + $0x3]]
    %s92 = sld [smem:[#allocation8 + $0x3]]
    %v93 = vstv %s92
    %v94 = vadd.f32 %v62, %v93
    %v95 = vand.u32 2147483647, %v94
    %v96 = vstv %s91
    %v97 = vmul.f32 %v96, %v95
    %v98 = vadd.f32 %v90, %v97
    %s99 = sld [smem:[#allocation4 + $0x4]]
    %s100 = sld [smem:[#allocation8 + $0x4]]
    %v101 = vstv %s100
    %v102 = vadd.f32 %v62, %v101
    %v103 = vand.u32 2147483647, %v102
    %v104 = vstv %s99
    %v105 = vmul.f32 %v104, %v103
    %v106 = vadd.f32 %v98, %v105
    %s107 = sld [smem:[#allocation4 + $0x5]]
    %s108 = sld [smem:[#allocation8 + $0x5]]
    %v109 = vstv %s108
    %v110 = vadd.f32 %v62, %v109
    %v111 = vand.u32 2147483647, %v110
    %v112 = vstv %s107
    %v113 = vmul.f32 %v112, %v111
    %v114 = vadd.f32 %v106, %v113
    %s115 = sld [smem:[#allocation4 + $0x6]]
    %s116 = sld [smem:[#allocation8 + $0x6]]
    %v117 = vstv %s116
    %v118 = vadd.f32 %v62, %v117
    %v119 = vand.u32 2147483647, %v118
    %v120 = vstv %s115
    %v121 = vmul.f32 %v120, %v119
    %v122 = vadd.f32 %v114, %v121
    %s123 = sld [smem:[#allocation4 + $0x7]]
    %s124 = sld [smem:[#allocation8 + $0x7]]
    %v125 = vstv %s124
    %v126 = vadd.f32 %v62, %v125
    %v127 = vand.u32 2147483647, %v126
    %v128 = vstv %s123
    %v129 = vmul.f32 %v128, %v127
    %v130 = vadd.f32 %v122, %v129
    %s131 = sld [smem:[#allocation4 + $0x8]]
    %s132 = sld [smem:[#allocation8 + $0x8]]
    %v133 = vstv %s132
    %v134 = vadd.f32 %v62, %v133
    %v135 = vand.u32 2147483647, %v134
    %v136 = vstv %s131
    %v137 = vmul.f32 %v136, %v135
    %v138 = vadd.f32 %v130, %v137
    %s139 = sld [smem:[#allocation4 + $0x9]]
    %s140 = sld [smem:[#allocation8 + $0x9]]
    %v141 = vstv %s140
    %v142 = vadd.f32 %v62, %v141
    %v143 = vand.u32 2147483647, %v142
    %v144 = vstv %s139
    %v145 = vmul.f32 %v144, %v143
    %v146 = vadd.f32 %v138, %v145
    %s147 = sld [smem:[#allocation4 + $0xa]]
    %s148 = sld [smem:[#allocation8 + $0xa]]
    %v149 = vstv %s148
    %v150 = vadd.f32 %v62, %v149
    %v151 = vand.u32 2147483647, %v150
    %v152 = vstv %s147
    %v153 = vmul.f32 %v152, %v151
    %v154 = vadd.f32 %v146, %v153
    %s155 = sld [smem:[#allocation4 + $0xb]]
    %s156 = sld [smem:[#allocation8 + $0xb]]
    %v157 = vstv %s156
    %v158 = vadd.f32 %v62, %v157
    %v159 = vand.u32 2147483647, %v158
    %v160 = vstv %s155
    %v161 = vmul.f32 %v160, %v159
    %v162 = vadd.f32 %v154, %v161
    %s163 = sld [smem:[#allocation4 + $0xc]]
    %s164 = sld [smem:[#allocation8 + $0xc]]
    %v165 = vstv %s164
    %v166 = vadd.f32 %v62, %v165
    %v167 = vand.u32 2147483647, %v166
    %v168 = vstv %s163
    %v169 = vmul.f32 %v168, %v167
    %v170 = vadd.f32 %v162, %v169
    %s171 = sld [smem:[#allocation4 + $0xd]]
    %s172 = sld [smem:[#allocation8 + $0xd]]
    %v173 = vstv %s172
    %v174 = vadd.f32 %v62, %v173
    %v175 = vand.u32 2147483647, %v174
    %v176 = vstv %s171
    %v177 = vmul.f32 %v176, %v175
    %v178 = vadd.f32 %v170, %v177
    %s179 = sld [smem:[#allocation4 + $0xe]]
    %s180 = sld [smem:[#allocation8 + $0xe]]
    %v181 = vstv %s180
    %v182 = vadd.f32 %v62, %v181
    %v183 = vand.u32 2147483647, %v182
    %v184 = vstv %s179
    %v185 = vmul.f32 %v184, %v183
    %v186 = vadd.f32 %v178, %v185
    %s187 = sld [smem:[#allocation4 + $0xf]]
    %s188 = sld [smem:[#allocation8 + $0xf]]
    %v189 = vstv %s188
    %v190 = vadd.f32 %v62, %v189
    %v191 = vand.u32 2147483647, %v190
    %v192 = vstv %s187
    %v193 = vmul.f32 %v192, %v191
    %v194 = vadd.f32 %v186, %v193
    %s195 = sld [smem:[#allocation4 + $0x10]]
    %s196 = sld [smem:[#allocation8 + $0x10]]
    %v197 = vstv %s196
    %v198 = vadd.f32 %v62, %v197
    %v199 = vand.u32 2147483647, %v198
    %v200 = vstv %s195
    %v201 = vmul.f32 %v200, %v199
    %v202 = vadd.f32 %v194, %v201
    %s203 = sld [smem:[#allocation4 + $0x11]]
    %s204 = sld [smem:[#allocation8 + $0x11]]
    %v205 = vstv %s204
    %v206 = vadd.f32 %v62, %v205
    %v207 = vand.u32 2147483647, %v206
    %v208 = vstv %s203
    %v209 = vmul.f32 %v208, %v207
    %v210 = vadd.f32 %v202, %v209
    %s211 = sld [smem:[#allocation4 + $0x12]]
    %s212 = sld [smem:[#allocation8 + $0x12]]
    %v213 = vstv %s212
    %v214 = vadd.f32 %v62, %v213
    %v215 = vand.u32 2147483647, %v214
    %v216 = vstv %s211
    %v217 = vmul.f32 %v216, %v215
    %v218 = vadd.f32 %v210, %v217
    %s219 = sld [smem:[#allocation4 + $0x13]]
    %s220 = sld [smem:[#allocation8 + $0x13]]
    %v221 = vstv %s220
    %v222 = vadd.f32 %v62, %v221
    %v223 = vand.u32 2147483647, %v222
    %v224 = vstv %s219
    %v225 = vmul.f32 %v224, %v223
    %v226 = vadd.f32 %v218, %v225
    %227 = vst [vmem:[#allocation11] sm:$0xff] %v226
    // Predicated region
    $region34: #{tpu_custom_call.1} parent=1 // pred_check
      _
    $region35: #{tpu_custom_call.1} parent=1 // pred_check_branch
      %229 = sbr.rel (0) target = $region37
    $region36: #{tpu_custom_call.1} parent=1 // pred_region
      %s231 = ssub.s32 128, 128
      %232 = vsyncadd [#allocation6], %s231
      %s234 = sshll.u32 [#allocation11], 4
      %s235 = int_to_ptr.vmem [resolvable:$true] %s234
      %237 = dma.vmem_to_hbm [thread:$0]  %s235, 128, %s5, [#allocation6]
    $region37: #{tpu_custom_call.1} parent=1 // pred_fallthru
      _
    // Predicated region
    $region38: #{tpu_custom_call.1} parent=1 // pred_check
      _
    $region39: #{tpu_custom_call.1} parent=1 // pred_check_branch
      %239 = sbr.rel (0) target = $region41
    $region40: #{tpu_custom_call.1} parent=1 // pred_region
      %240 = dma.done [#allocation6], 128
    $region41: #{tpu_custom_call.1} parent=1 // pred_fallthru
      _
    %241 = vsyncpa [#allocation5], 1
    %242 = vsyncpa [#allocation6], 1
    %243 = vsyncpa [#allocation7], 1
    %244 = vsyncpa [#allocation9], 1

</llo_original>
